<compile_context>
chip_gen: v7x
topology: tpu7x:2x2x1
jax: 0.10.0
libtpu: 0.0.40
codegen_flags: <defaults>
</compile_context>

<pallas_src>
import jax
import jax.numpy as jnp
from jax.experimental import pallas as pl
from jax.experimental.pallas import tpu as pltpu

_INV_SQRT2 = 0.7071067811865476


def _cap_kernel(z_ref, w1_ref, b1_ref, w2_ref, wd_ref, bd_ref, wdec_ref,
                bdec_ref, out_ref):
    """Fused AttnPool + prediction head for one batch tile.

    z    : [TB, 2*H]  -- [ z_poi | z_img ] packed along lanes
    w1   : [H, A]   b1 : [1, A]        (AttnPool.l1, A padded to a lane mult.)
    w2   : [1, A]                      (AttnPool.l2 weight, stored as a row)
    wd   : [H, H]   bd : [1, H]        (head.dense)
    wdec : [1, H]   bdec : [1, 1]      (head.decoder weight stored as a row)
    out  : [TB, 1]
    """
    tb = z_ref.shape[0]
    H = wd_ref.shape[0]

    z_poi = z_ref[:, :H]          # [TB, H], native dtype, lane-aligned slice
    z_img = z_ref[:, H:]          # [TB, H]

    # ---- AttnPool: one fused MXU pass + one tanh for both tokens ----------
    z2 = jnp.concatenate([z_poi, z_img], axis=0)                    # [2TB, H]
    t = jnp.tanh(
        jnp.dot(z2, w1_ref[...], preferred_element_type=jnp.float32)
        + b1_ref[...].astype(jnp.float32))                          # [2TB, A]
    # l2 has output width 1 -> VPU multiply + XLU lane reduction (no N=1 MXU).
    s = jnp.sum(t * w2_ref[...].astype(jnp.float32), axis=-1, keepdims=True)
    s_poi = s[:tb]                                                  # [TB, 1]
    s_img = s[tb:]                                                  # [TB, 1]

    # Numerically stable 2-way softmax over the token axis.
    m = jnp.maximum(s_poi, s_img)
    e_poi = jnp.exp(s_poi - m)
    e_img = jnp.exp(s_img - m)
    inv_denom = pl.reciprocal(e_poi + e_img, approx=True)           # EUP slot
    beta_poi = e_poi * inv_denom
    beta_img = e_img * inv_denom

    agg = (beta_poi * z_poi.astype(jnp.float32)
           + beta_img * z_img.astype(jnp.float32))                  # [TB, H]

    # ---- Prediction head: dense -> exact-erf GELU -> decoder --------------
    # TODO(synk): dropout (config['fdrop']) is identity in eval mode; not modeled.
    h = (jnp.dot(agg.astype(wd_ref.dtype), wd_ref[...],
                 preferred_element_type=jnp.float32)
         + bd_ref[...].astype(jnp.float32))                         # [TB, H]
    h = 0.5 * h * (1.0 + jax.lax.erf(h * _INV_SQRT2))

    # decoder output width 1 -> VPU multiply + lane reduction again.
    out = (jnp.sum(h * wdec_ref[...].astype(jnp.float32), axis=-1, keepdims=True)
           + bdec_ref[...].astype(jnp.float32))
    out_ref[...] = out.astype(out_ref.dtype)


def feature_cap_forward(region_emb, params, tb=256):
    """region_emb: [B, S, H] (S >= 2, only tokens 0/1 used). Returns [B, 1] f32."""
    B, S, H = region_emb.shape
    assert S >= 2
    if S != 2:
        # TODO(synk): for S > 2 the two CLS tokens are narrowed with one XLA
        # slice (one extra HBM pass); a (TB, 2, H) BlockSpec on the raw [B,S,H]
        # input would violate the (8,128) second-minor block rule when S > 2.
        region_emb = region_emb[:, :2, :]
    # Layout-preserving reshape: pack [z_poi | z_img] along lanes so the kernel
    # slices them at lane-aligned offsets with no relayout and the DMA grabs
    # only the two CLS tokens straight from HBM.
    z = region_emb.reshape(B, 2 * H)

    (w1, b1, w2, wd, bd, wdec, bdec) = params

    # Batch tile: multiple of 8, no bigger than the (padded) batch.
    tb = max(8, min(int(tb), pl.cdiv(B, 8) * 8))
    b_pad = pl.cdiv(B, tb) * tb
    if b_pad != B:
        z = jnp.pad(z, ((0, b_pad - B), (0, 0)))
    grid = (b_pad // tb,)

    def _tile_map(i):
        return (i, 0)

    def _const_map(i):
        return (0, 0)

    out = pl.pallas_call(
        _cap_kernel,
        out_shape=jax.ShapeDtypeStruct((b_pad, 1), jnp.float32),
        grid=grid,
        in_specs=[
            pl.BlockSpec((tb, 2 * H), _tile_map),   # activations: pipelined
            pl.BlockSpec(w1.shape, _const_map),     # weights: VMEM-resident
            pl.BlockSpec(b1.shape, _const_map),
            pl.BlockSpec(w2.shape, _const_map),
            pl.BlockSpec(wd.shape, _const_map),
            pl.BlockSpec(bd.shape, _const_map),
            pl.BlockSpec(wdec.shape, _const_map),
            pl.BlockSpec(bdec.shape, _const_map),
        ],
        out_specs=pl.BlockSpec((tb, 1), _tile_map),
        compiler_params=pltpu.CompilerParams(
            # Batch tiles are independent -> megacore-parallel on v7x;
            # harmless no-op on single-TC v5e/v6e.
            dimension_semantics=("parallel",),
            # Raise v5e's 16 MiB default scoped VMEM; still <= v6e/v7x defaults.
            # For H >~ 2K prefer bf16 wd and/or a K-tiled grid axis.
            vmem_limit_bytes=32 * 1024 * 1024,
        ),
    )(z, w1, b1, w2, wd, bd, wdec, bdec)

    return out[:B]


def init_params(key, hidden_size, attn_hidden=32, initializer_range=0.02,
                dtype=jnp.float32, lane=128):
    """Matches PreTrainedModel._init_weights: Linear W ~ N(0, init_range), b = 0.

    Weights are stored pre-transposed ([in, out]) for x @ W; the two width-1
    weights (AttnPool.l2, head.decoder) are stored as rows for the in-kernel
    lane reductions.  The AttnPool width is zero-padded to a lane multiple
    (exact: padded columns contribute tanh(0) * 0 = 0)."""
    H, A = hidden_size, attn_hidden
    a_pad = max(lane, pl.cdiv(A, lane) * lane)
    k1, k2, k3, k4 = jax.random.split(key, 4)
    w1 = jnp.zeros((H, a_pad), dtype).at[:, :A].set(
        (jax.random.normal(k1, (H, A), jnp.float32) * initializer_range).astype(dtype))
    b1 = jnp.zeros((1, a_pad), dtype)
    w2 = jnp.zeros((1, a_pad), dtype).at[:, :A].set(
        (jax.random.normal(k2, (1, A), jnp.float32) * initializer_range).astype(dtype))
    wd = (jax.random.normal(k3, (H, H), jnp.float32) * initializer_range).astype(dtype)
    bd = jnp.zeros((1, H), dtype)
    wdec = (jax.random.normal(k4, (1, H), jnp.float32) * initializer_range).astype(dtype)
    bdec = jnp.zeros((1, 1), dtype)
    return (w1, b1, w2, wd, bd, wdec, bdec)


def reference_forward(region_emb, params):
    """Pure-JAX reference of the PyTorch forward (agg='attn', eval mode)."""
    (w1, b1, w2, wd, bd, wdec, bdec) = [p.astype(jnp.float32) for p in params]
    z = region_emb[:, :2, :].astype(jnp.float32)            # [B, 2, H]
    s = jnp.tanh(z @ w1 + b1) @ w2.T                        # [B, 2, 1]
    beta = jax.nn.softmax(s, axis=1)
    agg = (beta * z).sum(axis=1)                            # [B, H]
    h = jax.nn.gelu(agg @ wd + bd, approximate=False)
    return h @ wdec.T + bdec                                # [B, 1]


if __name__ == "__main__":
    key = jax.random.PRNGKey(0)
    k_in, k_p, k_in2 = jax.random.split(key, 3)

    # Small demo shapes: B=8 regions, S=2 CLS tokens (poi, img), hidden=128.
    B, S, H = 8, 2, 128
    region_emb = jax.random.normal(k_in, (B, S, H), jnp.float32)
    params = init_params(k_p, hidden_size=H, attn_hidden=32,
                         initializer_range=0.02)

    out = jax.block_until_ready(feature_cap_forward(region_emb, params))
    ref = reference_forward(region_emb, params)
    assert out.shape == (B, 1), out.shape
    assert jnp.allclose(out, ref, atol=5e-4, rtol=5e-4), (out, ref)

    # Also exercise S > 2 (CLS narrowing) and B not divisible by the tile.
    B2, S2 = 20, 4
    region_emb2 = jax.random.normal(k_in2, (B2, S2, H), jnp.float32)
    out2 = jax.block_until_ready(feature_cap_forward(region_emb2, params, tb=16))
    ref2 = reference_forward(region_emb2, params)
    assert out2.shape == (B2, 1), out2.shape
    assert jnp.allclose(out2, ref2, atol=5e-4, rtol=5e-4), (out2, ref2)

    print("KERNEL_OK")
</pallas_src>

<mosaic_0001>
module attributes {stable_mosaic.version = 11 : i64} {
  func.func @_cap_kernel(%arg0: i32, %arg1: memref<8x256xf32, #tpu.memory_space<vmem>>, %arg2: memref<128x128xf32, #tpu.memory_space<vmem>>, %arg3: memref<1x128xf32, #tpu.memory_space<vmem>>, %arg4: memref<1x128xf32, #tpu.memory_space<vmem>>, %arg5: memref<128x128xf32, #tpu.memory_space<vmem>>, %arg6: memref<1x128xf32, #tpu.memory_space<vmem>>, %arg7: memref<1x128xf32, #tpu.memory_space<vmem>>, %arg8: memref<1x1xf32, #tpu.memory_space<vmem>>, %arg9: memref<8x1xf32, #tpu.memory_space<vmem>>) attributes {dimension_semantics = [#tpu.dimension_semantics<parallel>], iteration_bounds = array<i64: 1>, scalar_prefetch = 0 : i64, scratch_operands = 0 : i64, tpu.core_type = #tpu.core_type<tc>, window_params = [{transform_indices = @transform_0, window_bounds = array<i64: 8, 256>}, {pipeline_mode = #tpu.pipeline_mode<synchronous>, transform_indices = @transform_1, window_bounds = array<i64: 128, 128>}, {pipeline_mode = #tpu.pipeline_mode<synchronous>, transform_indices = @transform_2, window_bounds = array<i64: 1, 128>}, {pipeline_mode = #tpu.pipeline_mode<synchronous>, transform_indices = @transform_3, window_bounds = array<i64: 1, 128>}, {pipeline_mode = #tpu.pipeline_mode<synchronous>, transform_indices = @transform_4, window_bounds = array<i64: 128, 128>}, {pipeline_mode = #tpu.pipeline_mode<synchronous>, transform_indices = @transform_5, window_bounds = array<i64: 1, 128>}, {pipeline_mode = #tpu.pipeline_mode<synchronous>, transform_indices = @transform_6, window_bounds = array<i64: 1, 128>}, {pipeline_mode = #tpu.pipeline_mode<synchronous>, transform_indices = @transform_7, window_bounds = array<i64: 1, 1>}, {transform_indices = @transform_8, window_bounds = array<i64: 8, 1>}]} {
    %c0 = arith.constant 0 : index
    %c0_0 = arith.constant 0 : index
    %0 = vector.load %arg1[%c0, %c0_0] : memref<8x256xf32, #tpu.memory_space<vmem>>, vector<8x128xf32>
    %c0_1 = arith.constant 0 : index
    %c128 = arith.constant 128 : index
    %1 = vector.load %arg1[%c0_1, %c128] : memref<8x256xf32, #tpu.memory_space<vmem>>, vector<8x128xf32>
    %2 = tpu.concatenate %0, %1 in 0 : vector<8x128xf32>, vector<8x128xf32> -> vector<16x128xf32>
    %c0_2 = arith.constant 0 : index
    %c0_3 = arith.constant 0 : index
    %3 = vector.load %arg2[%c0_2, %c0_3] : memref<128x128xf32, #tpu.memory_space<vmem>>, vector<128x128xf32>
    %cst = arith.constant dense<0.000000e+00> : vector<16x128xf32>
    %4 = tpu.matmul %2, %3, %cst {dimension_numbers = #tpu.dot_dimension_numbers<[1], [0], [0], [1], [0, 0, 1, 1], [], []>} : vector<16x128xf32>, vector<128x128xf32>, vector<16x128xf32> -> vector<16x128xf32>
    %c0_4 = arith.constant 0 : index
    %c0_5 = arith.constant 0 : index
    %5 = vector.load %arg3[%c0_4, %c0_5] : memref<1x128xf32, #tpu.memory_space<vmem>>, vector<1x128xf32>
    %6 = vector.broadcast %5 : vector<1x128xf32> to vector<16x128xf32>
    %7 = arith.addf %4, %6 : vector<16x128xf32>
    %8 = math.tanh %7 : vector<16x128xf32>
    %c0_6 = arith.constant 0 : index
    %c0_7 = arith.constant 0 : index
    %9 = vector.load %arg4[%c0_6, %c0_7] : memref<1x128xf32, #tpu.memory_space<vmem>>, vector<1x128xf32>
    %10 = vector.broadcast %9 : vector<1x128xf32> to vector<16x128xf32>
    %11 = arith.mulf %8, %10 : vector<16x128xf32>
    %cst_8 = arith.constant dense<0.000000e+00> : vector<16xf32>
    %12 = vector.multi_reduction <add>, %11, %cst_8 [1] : vector<16x128xf32> to vector<16xf32>
    %13 = vector.shape_cast %12 : vector<16xf32> to vector<16x1xf32>
    %14 = vector.extract_strided_slice %13 {offsets = [0, 0], sizes = [8, 1], strides = [1, 1]} : vector<16x1xf32> to vector<8x1xf32>
    %15 = vector.extract_strided_slice %13 {offsets = [8, 0], sizes = [8, 1], strides = [1, 1]} : vector<16x1xf32> to vector<8x1xf32>
    %16 = arith.maximumf %14, %15 : vector<8x1xf32>
    %17 = arith.subf %14, %16 : vector<8x1xf32>
    %18 = math.exp %17 : vector<8x1xf32>
    %19 = arith.subf %15, %16 : vector<8x1xf32>
    %20 = math.exp %19 : vector<8x1xf32>
    %21 = arith.addf %18, %20 : vector<8x1xf32>
    %22 = tpu.reciprocal %21 {approx = true} : vector<8x1xf32> -> vector<8x1xf32>
    %23 = arith.mulf %18, %22 : vector<8x1xf32>
    %24 = arith.mulf %20, %22 : vector<8x1xf32>
    %25 = vector.broadcast %23 : vector<8x1xf32> to vector<8x128xf32>
    %26 = arith.mulf %25, %0 : vector<8x128xf32>
    %27 = vector.broadcast %24 : vector<8x1xf32> to vector<8x128xf32>
    %28 = arith.mulf %27, %1 : vector<8x128xf32>
    %29 = arith.addf %26, %28 : vector<8x128xf32>
    %c0_9 = arith.constant 0 : index
    %c0_10 = arith.constant 0 : index
    %30 = vector.load %arg5[%c0_9, %c0_10] : memref<128x128xf32, #tpu.memory_space<vmem>>, vector<128x128xf32>
    %cst_11 = arith.constant dense<0.000000e+00> : vector<8x128xf32>
    %31 = tpu.matmul %29, %30, %cst_11 {dimension_numbers = #tpu.dot_dimension_numbers<[1], [0], [0], [1], [0, 0, 1, 1], [], []>} : vector<8x128xf32>, vector<128x128xf32>, vector<8x128xf32> -> vector<8x128xf32>
    %c0_12 = arith.constant 0 : index
    %c0_13 = arith.constant 0 : index
    %32 = vector.load %arg6[%c0_12, %c0_13] : memref<1x128xf32, #tpu.memory_space<vmem>>, vector<1x128xf32>
    %33 = vector.broadcast %32 : vector<1x128xf32> to vector<8x128xf32>
    %34 = arith.addf %31, %33 : vector<8x128xf32>
    %cst_14 = arith.constant 5.000000e-01 : f32
    %35 = vector.broadcast %cst_14 : f32 to vector<8x128xf32>
    %36 = arith.mulf %35, %34 : vector<8x128xf32>
    %cst_15 = arith.constant 0.707106769 : f32
    %37 = vector.broadcast %cst_15 : f32 to vector<8x128xf32>
    %38 = arith.mulf %34, %37 : vector<8x128xf32>
    %39 = math.erf %38 : vector<8x128xf32>
    %cst_16 = arith.constant 1.000000e+00 : f32
    %40 = vector.broadcast %cst_16 : f32 to vector<8x128xf32>
    %41 = arith.addf %40, %39 : vector<8x128xf32>
    %42 = arith.mulf %36, %41 : vector<8x128xf32>
    %c0_17 = arith.constant 0 : index
    %c0_18 = arith.constant 0 : index
    %43 = vector.load %arg7[%c0_17, %c0_18] : memref<1x128xf32, #tpu.memory_space<vmem>>, vector<1x128xf32>
    %44 = vector.broadcast %43 : vector<1x128xf32> to vector<8x128xf32>
    %45 = arith.mulf %42, %44 : vector<8x128xf32>
    %cst_19 = arith.constant dense<0.000000e+00> : vector<8xf32>
    %46 = vector.multi_reduction <add>, %45, %cst_19 [1] : vector<8x128xf32> to vector<8xf32>
    %47 = vector.shape_cast %46 : vector<8xf32> to vector<8x1xf32>
    %c0_20 = arith.constant 0 : index
    %c0_21 = arith.constant 0 : index
    %48 = vector.load %arg8[%c0_20, %c0_21] : memref<1x1xf32, #tpu.memory_space<vmem>>, vector<1x1xf32>
    %49 = vector.broadcast %48 : vector<1x1xf32> to vector<8x1xf32>
    %50 = arith.addf %47, %49 : vector<8x1xf32>
    %c0_22 = arith.constant 0 : index
    %c0_23 = arith.constant 0 : index
    %51 = vector.load %arg9[%c0_22, %c0_23] : memref<8x1xf32, #tpu.memory_space<vmem>>, vector<8x1xf32>
    tpu.vector_store %arg9[%c0_22, %c0_23], %50 {strides = array<i32>} : memref<8x1xf32, #tpu.memory_space<vmem>>, vector<8x1xf32>,
    return
  }
  func.func @transform_0(%arg0: i32) -> (i32, i32) {
    %c0_i32 = arith.constant 0 : i32
    %c0_i32_0 = arith.constant 0 : i32
    return %arg0, %c0_i32 : i32, i32
  }
  func.func @transform_1(%arg0: i32) -> (i32, i32) {
    %c0_i32 = arith.constant 0 : i32
    %c0_i32_0 = arith.constant 0 : i32
    %c0_i32_1 = arith.constant 0 : i32
    return %c0_i32, %c0_i32_0 : i32, i32
  }
  func.func @transform_2(%arg0: i32) -> (i32, i32) {
    %c0_i32 = arith.constant 0 : i32
    %c0_i32_0 = arith.constant 0 : i32
    %c0_i32_1 = arith.constant 0 : i32
    return %c0_i32, %c0_i32_0 : i32, i32
  }
  func.func @transform_3(%arg0: i32) -> (i32, i32) {
    %c0_i32 = arith.constant 0 : i32
    %c0_i32_0 = arith.constant 0 : i32
    %c0_i32_1 = arith.constant 0 : i32
    return %c0_i32, %c0_i32_0 : i32, i32
  }
  func.func @transform_4(%arg0: i32) -> (i32, i32) {
    %c0_i32 = arith.constant 0 : i32
    %c0_i32_0 = arith.constant 0 : i32
    %c0_i32_1 = arith.constant 0 : i32
    return %c0_i32, %c0_i32_0 : i32, i32
  }
  func.func @transform_5(%arg0: i32) -> (i32, i32) {
    %c0_i32 = arith.constant 0 : i32
    %c0_i32_0 = arith.constant 0 : i32
    %c0_i32_1 = arith.constant 0 : i32
    return %c0_i32, %c0_i32_0 : i32, i32
  }
  func.func @transform_6(%arg0: i32) -> (i32, i32) {
    %c0_i32 = arith.constant 0 : i32
    %c0_i32_0 = arith.constant 0 : i32
    %c0_i32_1 = arith.constant 0 : i32
    return %c0_i32, %c0_i32_0 : i32, i32
  }
  func.func @transform_7(%arg0: i32) -> (i32, i32) {
    %c0_i32 = arith.constant 0 : i32
    %c0_i32_0 = arith.constant 0 : i32
    %c0_i32_1 = arith.constant 0 : i32
    return %c0_i32, %c0_i32_0 : i32, i32
  }
  func.func @transform_8(%arg0: i32) -> (i32, i32) {
    %c0_i32 = arith.constant 0 : i32
    %c0_i32_0 = arith.constant 0 : i32
    return %arg0, %c0_i32 : i32, i32
  }
}

</mosaic_0001>

<llo_original>
// kernel: tpu_custom_call.1
$region0: #{tpu_custom_call.1}
  #allocation0 [shape = 'u32[]', space=smem, size = 0x4, offset = 0x4, fixed_abs, tag = 'smem constant byte address 0x4 - core index']
  #allocation1 [shape = 'u32[144,128]{1,0:T(1,128)}', space=vmem, size = 0x12000, scoped, tag = 'internal scratch']
  #allocation2 [shape = 'f32[1,1]{1,0:T(1,128)S(1)}', space=vmem, size = 0x200, scoped, tag = 'scoped memory for tpu_custom_call.1']
  %s0 = inlined_call_operand.hbm [shape: f32[8,256], index: 0, kind: input, shape index: {}]
  %s1 = inlined_call_operand.hbm [shape: f32[128,128], index: 1, kind: input, shape index: {}]
  %s2 = inlined_call_operand.vmem [shape: f32[1,128], index: 2, kind: input, shape index: {}]
  %s3 = inlined_call_operand.vmem [shape: f32[1,128], index: 3, kind: input, shape index: {}]
  %s4 = inlined_call_operand.hbm [shape: f32[128,128], index: 4, kind: input, shape index: {}]
  %s5 = inlined_call_operand.vmem [shape: f32[1,128], index: 5, kind: input, shape index: {}]
  %s6 = inlined_call_operand.vmem [shape: f32[1,128], index: 6, kind: input, shape index: {}]
  %s7 = inlined_call_operand.<no memory space> [shape: f32[1,1], index: 7, kind: input, shape index: {}]
  %s8 = inlined_call_operand.vmem [shape: f32[8,1], index: 8, kind: output, shape index: {}]
  %s9 = sld [smem:[#allocation0]]
  $region54: #{tpu_custom_call.1} parent=0
    _
  %s11 = ssub.s32 1, %s9
  %s12 = scalar_select 0, %s11, %s9
  %v13 = vstv %s7
  %14 = vst [vmem:[#allocation2] sm:$0x1] %v13
  $region1: #{tpu_custom_call.1} parent=0
    #allocation3 [shape = 'u8[8192]{0}', space=vmem, size = 0x2000, scoped, tag = 'input window, operand 0, single buffered']
    #allocation4 [shape = 's32[1]{0}', space=sflag, size = 0x4, scoped, tag = 'scoped memory for tpu_custom_call.1']
    #allocation5 [shape = 'u8[65536]{0}', space=vmem, size = 0x10000, scoped, tag = 'input window, operand 1, single buffered']
    #allocation6 [shape = 's32[1]{0}', space=sflag, size = 0x4, scoped, tag = 'scoped memory for tpu_custom_call.1']
    #allocation7 [shape = 'u8[65536]{0}', space=vmem, size = 0x10000, scoped, tag = 'input window, operand 4, single buffered']
    %15 = vsyncpa [#allocation4], 0
    %16 = vsyncpa [#allocation6], 0
    // Predicated region
    $region2: #{tpu_custom_call.1} parent=1 // pred_check
      _
    $region3: #{tpu_custom_call.1} parent=1 // pred_check_branch
      %18 = sbr.rel (0) target = $region5
    $region4: #{tpu_custom_call.1} parent=1 // pred_region
      %s20 = ssub.s32 256, 256
      %21 = vsyncadd [#allocation4], %s20
      %s23 = sshll.u32 [#allocation3], 4
      %s24 = int_to_ptr.vmem [resolvable:$true] %s23
      %26 = dma.hbm_to_vmem [thread:$0]  %s0, 256, %s24, [#allocation4]
    $region5: #{tpu_custom_call.1} parent=1 // pred_fallthru
      _
    // Predicated region
    $region6: #{tpu_custom_call.1} parent=1 // pred_check
      _
    $region7: #{tpu_custom_call.1} parent=1 // pred_check_branch
      %28 = sbr.rel (0) target = $region9
    $region8: #{tpu_custom_call.1} parent=1 // pred_region
      %s30 = ssub.s32 2048, 2048
      %31 = vsyncadd [#allocation6], %s30
      %s32 = sshll.u32 [#allocation5], 4
      %s33 = int_to_ptr.vmem [resolvable:$true] %s32
      %38 = dma.hbm_to_vmem [thread:$0]  %s1, 2048, %s33, [#allocation6], 128, 128, 8
    $region9: #{tpu_custom_call.1} parent=1 // pred_fallthru
      _
    // Predicated region
    $region10: #{tpu_custom_call.1} parent=1 // pred_check
      _
    $region11: #{tpu_custom_call.1} parent=1 // pred_check_branch
      %40 = sbr.rel (0) target = $region13
    $region12: #{tpu_custom_call.1} parent=1 // pred_region
      _
    $region13: #{tpu_custom_call.1} parent=1 // pred_fallthru
      _
    // Predicated region
    $region14: #{tpu_custom_call.1} parent=1 // pred_check
      _
    $region15: #{tpu_custom_call.1} parent=1 // pred_check_branch
      %42 = sbr.rel (0) target = $region17
    $region16: #{tpu_custom_call.1} parent=1 // pred_region
      _
    $region17: #{tpu_custom_call.1} parent=1 // pred_fallthru
      _
    // Predicated region
    $region18: #{tpu_custom_call.1} parent=1 // pred_check
      _
    $region19: #{tpu_custom_call.1} parent=1 // pred_check_branch
      %44 = sbr.rel (0) target = $region21
    $region20: #{tpu_custom_call.1} parent=1 // pred_region
      %s46 = ssub.s32 2048, 2048
      %47 = vsyncadd [#allocation6], %s46
      %s48 = sshll.u32 [#allocation7], 4
      %s49 = int_to_ptr.vmem [resolvable:$true] %s48
      %54 = dma.hbm_to_vmem [thread:$0]  %s4, 2048, %s49, [#allocation6], 128, 128, 8
    $region21: #{tpu_custom_call.1} parent=1 // pred_fallthru
      _
    // Predicated region
    $region22: #{tpu_custom_call.1} parent=1 // pred_check
      _
    $region23: #{tpu_custom_call.1} parent=1 // pred_check_branch
      %56 = sbr.rel (0) target = $region25
    $region24: #{tpu_custom_call.1} parent=1 // pred_region
      _
    $region25: #{tpu_custom_call.1} parent=1 // pred_fallthru
      _
    // Predicated region
    $region26: #{tpu_custom_call.1} parent=1 // pred_check
      _
    $region27: #{tpu_custom_call.1} parent=1 // pred_check_branch
      %58 = sbr.rel (0) target = $region29
    $region28: #{tpu_custom_call.1} parent=1 // pred_region
      _
    $region29: #{tpu_custom_call.1} parent=1 // pred_fallthru
      _
    // Predicated region
    $region30: #{tpu_custom_call.1} parent=1 // pred_check
      _
    $region31: #{tpu_custom_call.1} parent=1 // pred_check_branch
      %60 = sbr.rel (0) target = $region33
    $region32: #{tpu_custom_call.1} parent=1 // pred_region
      _
    $region33: #{tpu_custom_call.1} parent=1 // pred_fallthru
      _
    // Predicated region
    $region34: #{tpu_custom_call.1} parent=1 // pred_check
      _
    $region35: #{tpu_custom_call.1} parent=1 // pred_check_branch
      %62 = sbr.rel (0) target = $region37
    $region36: #{tpu_custom_call.1} parent=1 // pred_region
      %63 = dma.done [#allocation4], 256
    $region37: #{tpu_custom_call.1} parent=1 // pred_fallthru
      _
    // Predicated region
    $region38: #{tpu_custom_call.1} parent=1 // pred_check
      _
    $region39: #{tpu_custom_call.1} parent=1 // pred_check_branch
      %65 = sbr.rel (0) target = $region41
    $region40: #{tpu_custom_call.1} parent=1 // pred_region
      %66 = dma.done [#allocation6], 2048
    $region41: #{tpu_custom_call.1} parent=1 // pred_fallthru
      _
    // Predicated region
    $region42: #{tpu_custom_call.1} parent=1 // pred_check
      _
    $region43: #{tpu_custom_call.1} parent=1 // pred_check_branch
      %68 = sbr.rel (0) target = $region45
    $region44: #{tpu_custom_call.1} parent=1 // pred_region
      %69 = dma.done [#allocation6], 2048
    $region45: #{tpu_custom_call.1} parent=1 // pred_fallthru
      _
    %v70 = vld [vmem:[#allocation3] sm:$0xff]
    %v71 = vld [vmem:[#allocation3 + $0x8] sm:$0xff]
    %v72 = vld [vmem:[#allocation5] sm:$0xff]
    %v73 = vld [vmem:[#allocation5 + $0x8] sm:$0xff]
    %v74 = vld [vmem:[#allocation5 + $0x10] sm:$0xff]
    %v75 = vld [vmem:[#allocation5 + $0x18] sm:$0xff]
    %v76 = vld [vmem:[#allocation5 + $0x20] sm:$0xff]
    %v77 = vld [vmem:[#allocation5 + $0x28] sm:$0xff]
    %v78 = vld [vmem:[#allocation5 + $0x30] sm:$0xff]
    %v79 = vld [vmem:[#allocation5 + $0x38] sm:$0xff]
    %v80 = vld [vmem:[#allocation5 + $0x40] sm:$0xff]
    %v81 = vld [vmem:[#allocation5 + $0x48] sm:$0xff]
    %v82 = vld [vmem:[#allocation5 + $0x50] sm:$0xff]
    %v83 = vld [vmem:[#allocation5 + $0x58] sm:$0xff]
    %v84 = vld [vmem:[#allocation5 + $0x60] sm:$0xff]
    %v85 = vld [vmem:[#allocation5 + $0x68] sm:$0xff]
    %v86 = vld [vmem:[#allocation5 + $0x70] sm:$0xff]
    %v87 = vld [vmem:[#allocation5 + $0x78] sm:$0xff]
    %v88 = vld [vmem:[%s2] sm:$0x1]
    %v90 = vlaneseq
    %v91 = vshrl.u32 %v90, 7
    %v92 = vsub.s32 0, %v91
    %v93 = vrot.slane %v88, %v92
    %95 = vmatprep.subr.mxu0 0.0
    %96 = vmatpush1.msra.mxu0 %v72
    %97 = vmatprep.subr.mxu0 0.0
    %98 = vmatpush1.msra.mxu0 %v73
    %99 = vmatprep.subr.mxu0 0.0
    %100 = vmatpush1.msra.mxu0 %v74
    %101 = vmatprep.subr.mxu0 0.0
    %102 = vmatpush1.msra.mxu0 %v75
    %103 = vmatprep.subr.mxu0 0.0
    %104 = vmatpush1.msra.mxu0 %v76
    %105 = vmatprep.subr.mxu0 0.0
    %106 = vmatpush1.msra.mxu0 %v77
    %107 = vmatprep.subr.mxu0 0.0
    %108 = vmatpush1.msra.mxu0 %v78
    %109 = vmatprep.subr.mxu0 0.0
    %110 = vmatpush1.msra.mxu0 %v79
    %111 = vmatprep.subr.mxu0 0.0
    %112 = vmatpush1.msra.mxu0 %v80
    %113 = vmatprep.subr.mxu0 0.0
    %114 = vmatpush1.msra.mxu0 %v81
    %115 = vmatprep.subr.mxu0 0.0
    %116 = vmatpush1.msra.mxu0 %v82
    %117 = vmatprep.subr.mxu0 0.0
    %118 = vmatpush1.msra.mxu0 %v83
    %119 = vmatprep.subr.mxu0 0.0
    %120 = vmatpush1.msra.mxu0 %v84
    %121 = vmatprep.subr.mxu0 0.0
    %122 = vmatpush1.msra.mxu0 %v85
    %123 = vmatprep.subr.mxu0 0.0
    %124 = vmatpush1.msra.mxu0 %v86
    %125 = vmatprep.subr.mxu0 0.0
    %126 = vmatpush1.msra.mxu0 %v87
    %127 = vmatprep.subr.mxu0 0.0
    %128 = vmatpush1.msra.mxu0 0.0
    %129 = vmatprep.subr.mxu0 0.0
    %130 = vmatpush1.msra.mxu0 0.0
    %131 = vmatprep.subr.mxu0 0.0
    %132 = vmatpush1.msra.mxu0 0.0
    %133 = vmatprep.subr.mxu0 0.0
    %134 = vmatpush1.msra.mxu0 0.0
    %135 = vmatprep.subr.mxu0 0.0
    %136 = vmatpush1.msra.mxu0 0.0
    %137 = vmatprep.subr.mxu0 0.0
    %138 = vmatpush1.msra.mxu0 0.0
    %139 = vmatprep.subr.mxu0 0.0
    %140 = vmatpush1.msra.mxu0 0.0
    %141 = vmatprep.subr.mxu0 0.0
    %142 = vmatpush1.msra.mxu0 0.0
    %143 = vmatprep.subr.mxu0 0.0
    %144 = vmatpush1.msra.mxu0 0.0
    %145 = vmatprep.subr.mxu0 0.0
    %146 = vmatpush1.msra.mxu0 0.0
    %147 = vmatprep.subr.mxu0 0.0
    %148 = vmatpush1.msra.mxu0 0.0
    %149 = vmatprep.subr.mxu0 0.0
    %150 = vmatpush1.msra.mxu0 0.0
    %151 = vmatprep.subr.mxu0 0.0
    %152 = vmatpush1.msra.mxu0 0.0
    %153 = vmatprep.subr.mxu0 0.0
    %154 = vmatpush1.msra.mxu0 0.0
    %155 = vmatprep.subr.mxu0 0.0
    %156 = vmatpush1.msra.mxu0 0.0
    %157 = vmatprep.subr.mxu0 0.0
    %158 = vmatpush1.msra.mxu0 0.0
    %159 = vmatprep.mubr.f32.mxu0 0.0
    %160 = vmatmul.mubr.f32.gmra.mrb[0].mxu0 %v70
    %v161 = vpop.f32.mrb[0].mxu0
    %v162 = vadd.f32 %v93, %v161
    %v163 = vpop.f32.mrb[0].mxu0
    %164 = vmatprep.mubr.f32.mxu0 0.0
    %165 = vmatmul.mubr.f32.gmra.mrb[0].mxu0 %v71
    %v166 = vpop.f32.mrb[0].mxu0
    %v167 = vadd.f32 %v93, %v166
    %v168 = vpop.f32.mrb[0].mxu0
    %169 = vdwg.mxu0
    %v170 = vtanh.pop %v162
    %v171 = vtanh.pop %v167
    %v172 = vld [vmem:[%s3] sm:$0x1]
    %v174 = vlaneseq
    %v175 = vshrl.u32 %v174, 7
    %v176 = vsub.s32 0, %v175
    %v177 = vrot.slane %v172, %v176
    %v179 = vmul.f32 %v170, %v177
    %v180 = vmul.f32 %v171, %v177
    %181 = vadd.xlane.f32.xlu0 %v179
    %v182 = vpop.xlane.xlu0 %181
    %183 = vadd.xlane.f32.xlu0 %v180
    %v184 = vpop.xlane.xlu0 %183
    %v185 = vmax.f32 %v182, %v184
    %v186 = vsub.f32 %v182, %v185
    %v187 = vmul.f32 %v186, 1.442695
    %v188 = vpow.pop %v187
    %v189 = vsub.f32 %v184, %v185
    %v190 = vmul.f32 %v189, 1.442695
    %v191 = vpow.pop %v190
    %v192 = vadd.f32 %v188, %v191
    %v193 = vrcp.pop %v192
    %v194 = vmul.f32 %v188, %v193
    %v195 = vmul.f32 %v191, %v193
    %v196 = vmul.f32 %v194, %v70
    %v197 = vmul.f32 %v195, %v71
    %v198 = vadd.f32 %v196, %v197
    %v199 = vld [vmem:[#allocation7] sm:$0xff]
    %v200 = vld [vmem:[#allocation7 + $0x8] sm:$0xff]
    %v201 = vld [vmem:[#allocation7 + $0x10] sm:$0xff]
    %v202 = vld [vmem:[#allocation7 + $0x18] sm:$0xff]
    %v203 = vld [vmem:[#allocation7 + $0x20] sm:$0xff]
    %v204 = vld [vmem:[#allocation7 + $0x28] sm:$0xff]
    %v205 = vld [vmem:[#allocation7 + $0x30] sm:$0xff]
    %v206 = vld [vmem:[#allocation7 + $0x38] sm:$0xff]
    %v207 = vld [vmem:[#allocation7 + $0x40] sm:$0xff]
    %v208 = vld [vmem:[#allocation7 + $0x48] sm:$0xff]
    %v209 = vld [vmem:[#allocation7 + $0x50] sm:$0xff]
    %v210 = vld [vmem:[#allocation7 + $0x58] sm:$0xff]
    %v211 = vld [vmem:[#allocation7 + $0x60] sm:$0xff]
    %v212 = vld [vmem:[#allocation7 + $0x68] sm:$0xff]
    %v213 = vld [vmem:[#allocation7 + $0x70] sm:$0xff]
    %v214 = vld [vmem:[#allocation7 + $0x78] sm:$0xff]
    %v215 = vld [vmem:[%s5] sm:$0x1]
    %v217 = vlaneseq
    %v218 = vshrl.u32 %v217, 7
    %v219 = vsub.s32 0, %v218
    %v220 = vrot.slane %v215, %v219
    %222 = vmatprep.subr.mxu0 0.0
    %223 = vmatpush1.msra.mxu0 %v199
    %224 = vmatprep.subr.mxu0 0.0
    %225 = vmatpush1.msra.mxu0 %v200
    %226 = vmatprep.subr.mxu0 0.0
    %227 = vmatpush1.msra.mxu0 %v201
    %228 = vmatprep.subr.mxu0 0.0
    %229 = vmatpush1.msra.mxu0 %v202
    %230 = vmatprep.subr.mxu0 0.0
    %231 = vmatpush1.msra.mxu0 %v203
    %232 = vmatprep.subr.mxu0 0.0
    %233 = vmatpush1.msra.mxu0 %v204
    %234 = vmatprep.subr.mxu0 0.0
    %235 = vmatpush1.msra.mxu0 %v205
    %236 = vmatprep.subr.mxu0 0.0
    %237 = vmatpush1.msra.mxu0 %v206
    %238 = vmatprep.subr.mxu0 0.0
    %239 = vmatpush1.msra.mxu0 %v207
    %240 = vmatprep.subr.mxu0 0.0
    %241 = vmatpush1.msra.mxu0 %v208
    %242 = vmatprep.subr.mxu0 0.0
    %243 = vmatpush1.msra.mxu0 %v209
    %244 = vmatprep.subr.mxu0 0.0
    %245 = vmatpush1.msra.mxu0 %v210
    %246 = vmatprep.subr.mxu0 0.0
    %247 = vmatpush1.msra.mxu0 %v211
    %248 = vmatprep.subr.mxu0 0.0
    %249 = vmatpush1.msra.mxu0 %v212
    %250 = vmatprep.subr.mxu0 0.0
    %251 = vmatpush1.msra.mxu0 %v213
    %252 = vmatprep.subr.mxu0 0.0
    %253 = vmatpush1.msra.mxu0 %v214
    %254 = vmatprep.subr.mxu0 0.0
    %255 = vmatpush1.msra.mxu0 0.0
    %256 = vmatprep.subr.mxu0 0.0
    %257 = vmatpush1.msra.mxu0 0.0
    %258 = vmatprep.subr.mxu0 0.0
    %259 = vmatpush1.msra.mxu0 0.0
    %260 = vmatprep.subr.mxu0 0.0
    %261 = vmatpush1.msra.mxu0 0.0
    %262 = vmatprep.subr.mxu0 0.0
    %263 = vmatpush1.msra.mxu0 0.0
    %264 = vmatprep.subr.mxu0 0.0
    %265 = vmatpush1.msra.mxu0 0.0
    %266 = vmatprep.subr.mxu0 0.0
    %267 = vmatpush1.msra.mxu0 0.0
    %268 = vmatprep.subr.mxu0 0.0
    %269 = vmatpush1.msra.mxu0 0.0
    %270 = vmatprep.subr.mxu0 0.0
    %271 = vmatpush1.msra.mxu0 0.0
    %272 = vmatprep.subr.mxu0 0.0
    %273 = vmatpush1.msra.mxu0 0.0
    %274 = vmatprep.subr.mxu0 0.0
    %275 = vmatpush1.msra.mxu0 0.0
    %276 = vmatprep.subr.mxu0 0.0
    %277 = vmatpush1.msra.mxu0 0.0
    %278 = vmatprep.subr.mxu0 0.0
    %279 = vmatpush1.msra.mxu0 0.0
    %280 = vmatprep.subr.mxu0 0.0
    %281 = vmatpush1.msra.mxu0 0.0
    %282 = vmatprep.subr.mxu0 0.0
    %283 = vmatpush1.msra.mxu0 0.0
    %284 = vmatprep.subr.mxu0 0.0
    %285 = vmatpush1.msra.mxu0 0.0
    %286 = vmatprep.mubr.f32.mxu0 0.0
    %287 = vmatmul.mubr.f32.gmra.mrb[0].mxu0 %v198
    %v288 = vpop.f32.mrb[0].mxu0
    %v289 = vadd.f32 %v220, %v288
    %v290 = vpop.f32.mrb[0].mxu0
    %291 = vdwg.mxu0
    %v292 = vmul.f32 %v289, 0.5
    %v293 = vmul.f32 %v289, 0.70710677
    %v294 = verf.f32.pop %v293
    %v295 = vadd.f32 %v294, 1.0
    %v296 = vmul.f32 %v292, %v295
    %v297 = vld [vmem:[%s6] sm:$0x1]
    %v299 = vlaneseq
    %v300 = vshrl.u32 %v299, 7
    %v301 = vsub.s32 0, %v300
    %v302 = vrot.slane %v297, %v301
    %v304 = vmul.f32 %v296, %v302
    %305 = vadd.xlane.f32.xlu0 %v304
    %v306 = vpop.xlane.xlu0 %305
    %v307 = vld [vmem:[#allocation2] sm:$0x1]
    %v309 = vlaneseq
    %v310 = vshrl.u32 %v309, 7
    %v311 = vsub.s32 0, %v310
    %v312 = vrot.slane %v307, %v311
    %v314 = vadd.f32 %v306, %v312
    %vm315 = vcmask 7168
    %316 = vst.msk [vmem:[%s8] sm:$0xff] %vm315, %v314
    // Predicated region
    $region46: #{tpu_custom_call.1} parent=1 // pred_check
      _
    $region47: #{tpu_custom_call.1} parent=1 // pred_check_branch
      %318 = sbr.rel (0) target = $region49
    $region48: #{tpu_custom_call.1} parent=1 // pred_region
      _
    $region49: #{tpu_custom_call.1} parent=1 // pred_fallthru
      _
    // Predicated region
    $region50: #{tpu_custom_call.1} parent=1 // pred_check
      _
    $region51: #{tpu_custom_call.1} parent=1 // pred_check_branch
      %320 = sbr.rel (0) target = $region53
    $region52: #{tpu_custom_call.1} parent=1 // pred_region
      _
    $region53: #{tpu_custom_call.1} parent=1 // pred_fallthru
      _
    %321 = vsyncpa [#allocation4], 1
    %322 = vsyncpa [#allocation6], 1

</llo_original>
